<compile_context>
chip_gen: v7x
topology: tpu7x:2x2x1
jax: 0.10.0
libtpu: 0.0.40
codegen_flags: <defaults>
</compile_context>

<pallas_src>
import functools
import math

import jax
import jax.numpy as jnp
from jax.experimental import pallas as pl
from jax.experimental.pallas import tpu as pltpu


# ---------------------------------------------------------------------------
# Fused (LayerNorm) -> Linear -> (gelu_new) -> (+residual) kernel
# ---------------------------------------------------------------------------

def _fused_linear_kernel(*refs, ln, residual, activation, eps):
    idx = 0
    x_ref = refs[idx]; idx += 1
    if ln:
        g_ref = refs[idx]; b_ln_ref = refs[idx + 1]; idx += 2
    w_ref = refs[idx]; bias_ref = refs[idx + 1]; idx += 2
    if residual:
        res_ref = refs[idx]; idx += 1
    o_ref = refs[idx]

    x = x_ref[...]
    if ln:
        mu = jnp.mean(x, axis=-1, keepdims=True)
        var = jnp.mean((x - mu) ** 2, axis=-1, keepdims=True)   # biased, like torch
        x = (x - mu) * jax.lax.rsqrt(var + eps) * g_ref[...] + b_ln_ref[...]

    y = jnp.dot(x, w_ref[...], preferred_element_type=jnp.float32)
    y = y + bias_ref[...]

    if activation == "gelu_new":
        # GPT-2 tanh-approximated GELU
        y = 0.5 * y * (1.0 + jnp.tanh(
            math.sqrt(2.0 / math.pi) * (y + 0.044715 * (y ** 3))))

    if residual:
        y = y + res_ref[...]

    o_ref[...] = y


def fused_linear(x, w, b, *, gamma=None, beta=None, residual=None,
                 activation=None, eps=1e-5, row_block=256):
    """y = (maybe LN(x)) @ w + b (maybe gelu_new) (maybe + residual).

    x: (M, K) f32, w: (K, N) f32, b: (N,), gamma/beta: (K,), residual: (M, N).
    """
    M, K = x.shape
    N = w.shape[1]
    rt = M if M <= row_block else row_block           # big rows; 256 is 8/128 aligned
    grid = (pl.cdiv(M, rt),)
    has_ln = gamma is not None
    has_res = residual is not None

    in_specs = [pl.BlockSpec((rt, K), lambda i: (i, 0))]
    args = [x]
    if has_ln:
        in_specs += [pl.BlockSpec((1, K), lambda i: (0, 0)),
                     pl.BlockSpec((1, K), lambda i: (0, 0))]
        args += [gamma.reshape(1, K), beta.reshape(1, K)]
    # Weight block index is constant across the grid -> Pallas does not re-DMA it.
    in_specs += [pl.BlockSpec((K, N), lambda i: (0, 0)),
                 pl.BlockSpec((1, N), lambda i: (0, 0))]
    args += [w, b.reshape(1, N)]
    if has_res:
        in_specs += [pl.BlockSpec((rt, N), lambda i: (i, 0))]
        args += [residual]

    kernel = functools.partial(_fused_linear_kernel, ln=has_ln,
                               residual=has_res, activation=activation, eps=eps)
    return pl.pallas_call(
        kernel,
        out_shape=jax.ShapeDtypeStruct((M, N), jnp.float32),
        grid=grid,
        in_specs=in_specs,
        out_specs=pl.BlockSpec((rt, N), lambda i: (i, 0)),
        compiler_params=pltpu.CompilerParams(
            dimension_semantics=("parallel",)),
    )(*args)


# ---------------------------------------------------------------------------
# Input embedding fused with positional-embedding add
# ---------------------------------------------------------------------------

def _in_embed_kernel(p_ref, w_ref, b_ref, wpe_ref, o_ref):
    y = jnp.dot(p_ref[0], w_ref[...], preferred_element_type=jnp.float32)
    o_ref[0] = y + b_ref[...] + wpe_ref[...]


def in_embed(prompt, w, b, wpe):
    """prompt: (B, T, P), w: (P, D), b: (D,), wpe: (T, D) -> (B, T, D)."""
    B, T, P = prompt.shape
    D = w.shape[1]
    return pl.pallas_call(
        _in_embed_kernel,
        out_shape=jax.ShapeDtypeStruct((B, T, D), jnp.float32),
        grid=(B,),
        in_specs=[
            pl.BlockSpec((1, T, P), lambda i: (i, 0, 0)),
            pl.BlockSpec((P, D), lambda i: (0, 0)),
            pl.BlockSpec((1, D), lambda i: (0, 0)),
            pl.BlockSpec((T, D), lambda i: (0, 0)),
        ],
        out_specs=pl.BlockSpec((1, T, D), lambda i: (i, 0, 0)),
        compiler_params=pltpu.CompilerParams(
            dimension_semantics=("parallel",)),
    )(prompt, w, b.reshape(1, D), wpe)


# ---------------------------------------------------------------------------
# Causal multi-head attention: all heads of one batch element per grid step.
# Head split/merge is done by lane slicing inside the kernel (no HBM transposes).
# ---------------------------------------------------------------------------

def _attn_kernel(qkv_ref, o_ref, *, n_head, scale):
    T = qkv_ref.shape[1]
    D = o_ref.shape[2]
    hd = D // n_head

    qkv = qkv_ref[0]                       # (T, 3D)
    q_all = qkv[:, :D] * scale             # scale once for all heads
    k_all = qkv[:, D:2 * D]
    v_all = qkv[:, 2 * D:3 * D]

    row = jax.lax.broadcasted_iota(jnp.int32, (T, T), 0)
    col = jax.lax.broadcasted_iota(jnp.int32, (T, T), 1)
    causal = row >= col                    # hoisted out of the head loop

    for h in range(n_head):                # static unrolled head loop
        sl = slice(h * hd, (h + 1) * hd)
        # contract last dims of q and k directly -> no explicit k.T
        s = jax.lax.dot_general(q_all[:, sl], k_all[:, sl],
                                (((1,), (1,)), ((), ())),
                                preferred_element_type=jnp.float32)   # (T, T)
        s = jnp.where(causal, s, -1e30)
        m = jnp.max(s, axis=-1, keepdims=True)
        p = jnp.exp(s - m)
        p = p * pl.reciprocal(jnp.sum(p, axis=-1, keepdims=True), approx=True)
        out_h = jnp.dot(p, v_all[:, sl], preferred_element_type=jnp.float32)
        o_ref[0, :, h * hd:(h + 1) * hd] = out_h


def causal_attention(qkv, n_head):
    """qkv: (B, T, 3D) f32 (GPT-2 c_attn layout [q|k|v]) -> (B, T, D) f32."""
    B, T, three_d = qkv.shape
    D = three_d // 3
    hd = D // n_head
    scale = 1.0 / math.sqrt(hd)
    return pl.pallas_call(
        functools.partial(_attn_kernel, n_head=n_head, scale=scale),
        out_shape=jax.ShapeDtypeStruct((B, T, D), jnp.float32),
        grid=(B,),
        in_specs=[pl.BlockSpec((1, T, three_d), lambda i: (i, 0, 0))],
        out_specs=pl.BlockSpec((1, T, D), lambda i: (i, 0, 0)),
        compiler_params=pltpu.CompilerParams(
            dimension_semantics=("parallel",)),
    )(qkv)


# ---------------------------------------------------------------------------
# Parameter construction (deterministic, synthetic)
# ---------------------------------------------------------------------------

def init_params(key, prompt_dim, n_positions, embedding_dim, n_layer, n_head):
    D = embedding_dim
    std = 0.02

    def normal(k, shape):
        return (std * jax.random.normal(k, shape)).astype(jnp.float32)

    keys = iter(jax.random.split(key, 4 + 4 * n_layer))

    out_w = normal(next(keys), (D, 1))
    # Pad the width-1 output head to 128 lanes -> lane-dense Pallas store.
    out_w_pad = jnp.zeros((D, 128), jnp.float32).at[:, 0].set(out_w[:, 0])
    out_b_pad = jnp.zeros((128,), jnp.float32)

    params = {
        "n_head": n_head,
        "in_w": normal(next(keys), (prompt_dim, D)),
        "in_b": jnp.zeros((D,), jnp.float32),
        "wpe": normal(next(keys), (3 * n_positions, D)),   # GPT2Config(n_positions=3*n_positions)
        "out_w_pad": out_w_pad,
        "out_b_pad": out_b_pad,
        "lnf_g": jnp.ones((D,), jnp.float32),
        "lnf_b": jnp.zeros((D,), jnp.float32),
        "layers": [],
    }
    for _ in range(n_layer):
        params["layers"].append({
            "ln1_g": jnp.ones((D,), jnp.float32),
            "ln1_b": jnp.zeros((D,), jnp.float32),
            "attn_w": normal(next(keys), (D, 3 * D)),   # GPT2 Conv1D: x @ W + b
            "attn_b": jnp.zeros((3 * D,), jnp.float32),
            "proj_w": normal(next(keys), (D, D)),
            "proj_b": jnp.zeros((D,), jnp.float32),
            "ln2_g": jnp.ones((D,), jnp.float32),
            "ln2_b": jnp.zeros((D,), jnp.float32),
            "fc_w": normal(next(keys), (D, 4 * D)),
            "fc_b": jnp.zeros((4 * D,), jnp.float32),
            "fc_proj_w": normal(next(keys), (4 * D, D)),
            "fc_proj_b": jnp.zeros((D,), jnp.float32),
        })
    return params


# ---------------------------------------------------------------------------
# Forward pass (matches LinearDualLearnerModel.forward semantics)
# ---------------------------------------------------------------------------

def linear_dual_learner_forward(params, prompt, inds=None):
    """prompt: (B, T, prompt_dim) f32 with T == 3*n_points -> (B, len(inds)) f32."""
    B, T, P = prompt.shape
    D = params["wpe"].shape[1]
    H = params["n_head"]

    # in_embeddings + learned positional embeddings (dropout probs are 0.0)
    wpe = params["wpe"][:T]                               # (T, D)
    x = in_embed(prompt, params["in_w"], params["in_b"], wpe)    # (B, T, D)
    x = x.reshape(B * T, D)

    for lp in params["layers"]:
        # --- attention sub-block: x = x + c_proj(attn(ln_1(x))) ---
        qkv = fused_linear(x, lp["attn_w"], lp["attn_b"],
                           gamma=lp["ln1_g"], beta=lp["ln1_b"])      # (B*T, 3D)
        a = causal_attention(qkv.reshape(B, T, 3 * D), n_head=H)     # (B, T, D)
        x = fused_linear(a.reshape(B * T, D), lp["proj_w"], lp["proj_b"],
                         residual=x)                                  # residual fused

        # --- MLP sub-block: x = x + c_proj(gelu(c_fc(ln_2(x)))) ---
        h = fused_linear(x, lp["fc_w"], lp["fc_b"],
                         gamma=lp["ln2_g"], beta=lp["ln2_b"],
                         activation="gelu_new")                       # (B*T, 4D)
        x = fused_linear(h, lp["fc_proj_w"], lp["fc_proj_b"],
                         residual=x)                                  # residual fused

    # final layer norm + out_embeddings (padded to 128 lanes; column 0 is the head)
    pred = fused_linear(x, params["out_w_pad"], params["out_b_pad"],
                        gamma=params["lnf_g"], beta=params["lnf_b"])  # (B*T, 128)
    pred = pred[:, 0].reshape(B, T)

    # pred[:, ::3, 0][:, inds]  (tiny strided gather left in plain XLA)
    if inds is None:
        inds = jnp.arange(T // 3)
    else:
        inds = jnp.asarray(inds)
    return pred[:, ::3][:, inds]


# ---------------------------------------------------------------------------
# Main
# ---------------------------------------------------------------------------

if __name__ == "__main__":
    # Small, forward-consistent shapes (sequence length = 3 * n_positions)
    prompt_dim = 4
    n_positions = 8
    embedding_dim = 32
    n_layer = 2
    n_head = 4
    batch = 2
    seq = 3 * n_positions        # 24

    key = jax.random.PRNGKey(0)
    pkey, xkey = jax.random.split(key)

    params = init_params(pkey, prompt_dim, n_positions,
                         embedding_dim, n_layer, n_head)
    prompt = jax.random.normal(xkey, (batch, seq, prompt_dim),
                               dtype=jnp.float32)

    out = linear_dual_learner_forward(params, prompt)   # (batch, seq // 3)
    out = jax.block_until_ready(out)
    assert out.shape == (batch, seq // 3)
    print("KERNEL_OK")
</pallas_src>

<mosaic_0001>
module attributes {stable_mosaic.version = 11 : i64} {
  func.func @_in_embed_kernel(%arg0: i32, %arg1: memref<1x24x4xf32, #tpu.memory_space<vmem>>, %arg2: memref<4x32xf32, #tpu.memory_space<vmem>>, %arg3: memref<1x32xf32, #tpu.memory_space<vmem>>, %arg4: memref<24x32xf32, #tpu.memory_space<vmem>>, %arg5: memref<1x24x32xf32, #tpu.memory_space<vmem>>) attributes {dimension_semantics = [#tpu.dimension_semantics<parallel>], iteration_bounds = array<i64: 2>, scalar_prefetch = 0 : i64, scratch_operands = 0 : i64, tpu.core_type = #tpu.core_type<tc>, window_params = [{transform_indices = @transform_0, window_bounds = array<i64: 1, 24, 4>}, {pipeline_mode = #tpu.pipeline_mode<synchronous>, transform_indices = @transform_1, window_bounds = array<i64: 4, 32>}, {pipeline_mode = #tpu.pipeline_mode<synchronous>, transform_indices = @transform_2, window_bounds = array<i64: 1, 32>}, {pipeline_mode = #tpu.pipeline_mode<synchronous>, transform_indices = @transform_3, window_bounds = array<i64: 24, 32>}, {transform_indices = @transform_4, window_bounds = array<i64: 1, 24, 32>}]} {
    %c0 = arith.constant 0 : index
    %c0_0 = arith.constant 0 : index
    %c0_1 = arith.constant 0 : index
    %0 = vector.load %arg1[%c0, %c0_0, %c0_1] : memref<1x24x4xf32, #tpu.memory_space<vmem>>, vector<1x24x4xf32>
    %1 = vector.shape_cast %0 : vector<1x24x4xf32> to vector<24x4xf32>
    %c0_2 = arith.constant 0 : index
    %c0_3 = arith.constant 0 : index
    %2 = vector.load %arg2[%c0_2, %c0_3] : memref<4x32xf32, #tpu.memory_space<vmem>>, vector<4x32xf32>
    %cst = arith.constant dense<0.000000e+00> : vector<24x32xf32>
    %3 = tpu.matmul %1, %2, %cst {dimension_numbers = #tpu.dot_dimension_numbers<[1], [0], [0], [1], [0, 0, 1, 1], [], []>} : vector<24x4xf32>, vector<4x32xf32>, vector<24x32xf32> -> vector<24x32xf32>
    %c0_4 = arith.constant 0 : index
    %c0_5 = arith.constant 0 : index
    %4 = vector.load %arg3[%c0_4, %c0_5] : memref<1x32xf32, #tpu.memory_space<vmem>>, vector<1x32xf32>
    %5 = vector.broadcast %4 : vector<1x32xf32> to vector<24x32xf32>
    %6 = arith.addf %3, %5 : vector<24x32xf32>
    %c0_6 = arith.constant 0 : index
    %c0_7 = arith.constant 0 : index
    %7 = vector.load %arg4[%c0_6, %c0_7] : memref<24x32xf32, #tpu.memory_space<vmem>>, vector<24x32xf32>
    %8 = arith.addf %6, %7 : vector<24x32xf32>
    %c0_8 = arith.constant 0 : index
    %c0_9 = arith.constant 0 : index
    %c0_10 = arith.constant 0 : index
    %9 = vector.load %arg5[%c0_8, %c0_9, %c0_10] : memref<1x24x32xf32, #tpu.memory_space<vmem>>, vector<1x24x32xf32>
    %10 = vector.shape_cast %9 : vector<1x24x32xf32> to vector<24x32xf32>
    %11 = vector.shape_cast %8 : vector<24x32xf32> to vector<1x24x32xf32>
    tpu.vector_store %arg5[%c0_8, %c0_9, %c0_10], %11 {strides = array<i32>} : memref<1x24x32xf32, #tpu.memory_space<vmem>>, vector<1x24x32xf32>,
    return
  }
  func.func @transform_0(%arg0: i32) -> (i32, i32, i32) {
    %c0_i32 = arith.constant 0 : i32
    %c0_i32_0 = arith.constant 0 : i32
    %c0_i32_1 = arith.constant 0 : i32
    return %arg0, %c0_i32, %c0_i32_0 : i32, i32, i32
  }
  func.func @transform_1(%arg0: i32) -> (i32, i32) {
    %c0_i32 = arith.constant 0 : i32
    %c0_i32_0 = arith.constant 0 : i32
    %c0_i32_1 = arith.constant 0 : i32
    return %c0_i32, %c0_i32_0 : i32, i32
  }
  func.func @transform_2(%arg0: i32) -> (i32, i32) {
    %c0_i32 = arith.constant 0 : i32
    %c0_i32_0 = arith.constant 0 : i32
    %c0_i32_1 = arith.constant 0 : i32
    return %c0_i32, %c0_i32_0 : i32, i32
  }
  func.func @transform_3(%arg0: i32) -> (i32, i32) {
    %c0_i32 = arith.constant 0 : i32
    %c0_i32_0 = arith.constant 0 : i32
    %c0_i32_1 = arith.constant 0 : i32
    return %c0_i32, %c0_i32_0 : i32, i32
  }
  func.func @transform_4(%arg0: i32) -> (i32, i32, i32) {
    %c0_i32 = arith.constant 0 : i32
    %c0_i32_0 = arith.constant 0 : i32
    %c0_i32_1 = arith.constant 0 : i32
    return %arg0, %c0_i32, %c0_i32_0 : i32, i32, i32
  }
}

</mosaic_0001>

<llo_original>
// kernel: tpu_custom_call.1
$region0: #{tpu_custom_call.1}
  #allocation0 [shape = 'u32[]', space=smem, size = 0x4, offset = 0x4, fixed_abs, tag = 'smem constant byte address 0x4 - core index']
  #allocation1 [shape = 'u32[144,128]{1,0:T(1,128)}', space=vmem, size = 0x12000, scoped, tag = 'internal scratch']
  %s0 = inlined_call_operand.vmem [shape: f32[2,24,4], index: 0, kind: input, shape index: {}]
  %s1 = inlined_call_operand.vmem [shape: f32[4,32], index: 1, kind: input, shape index: {}]
  %s2 = inlined_call_operand.vmem [shape: f32[1,32], index: 2, kind: input, shape index: {}]
  %s3 = inlined_call_operand.vmem [shape: f32[24,32], index: 3, kind: input, shape index: {}]
  %s4 = inlined_call_operand.hbm [shape: f32[2,24,32], index: 4, kind: output, shape index: {}]
  %s5 = sld [smem:[#allocation0]]
  $region49: #{tpu_custom_call.1} parent=0
    _
  %s7 = ssub.s32 1, %s5
  %s8 = scalar_select 0, %s7, %s5
  $region1: #{tpu_custom_call.1} parent=0
    #allocation2 [shape = 'u8[24576]{0}', space=vmem, size = 0x6000, scoped, tag = 'output window, operand 0']
    #allocation3 [shape = 's32[2]{0}', space=sflag, size = 0x8, scoped, tag = 'scoped memory for tpu_custom_call.1']
    %9 = vsyncpa [#allocation3], 0
    %s10 = scalar_lea.sflag [#allocation3], 1
    %11 = vsyncpa %s10, 0
    loop: start=0, step=1, limit=4
    $region2: #{tpu_custom_call.1} parent=1 // loop_pre_header
      _
    $region3: #{tpu_custom_call.1} parent=1 // loop_header
      %s13 = sphi 0, %s17
      %p14 = scmp.ge.s32.totalorder %s13, 4
      %s23 = sphi 0, %s25
      %s26 = sphi 0, %s23
      %s27 = sphi 0, %s26
      %s43 = sphi 0, %s27
      %s47 = sphi 0, %s47
      %s49 = sphi 0, %s47
      %s50 = sphi 0, %s49
      %s64 = sphi 0, %s50
      %s68 = sphi 0, %s68
      %s70 = sphi 0, %s68
      %s71 = sphi 0, %s70
      %s85 = sphi 0, %s71
      %s89 = sphi 0, %s89
      %s91 = sphi 0, %s89
      %s92 = sphi 0, %s91
      %s106 = sphi 0, %s92
      %s112 = sphi 0, %s114
      %s115 = sphi 0, %s112
      %s116 = sphi 0, %s115
      %s132 = sphi 0, %s116
    $region4: #{tpu_custom_call.1} parent=1 // loop_header_branch
      %16 = sbr.rel (%p14) target = $region8
    $region5: #{tpu_custom_call.1} parent=1 // loop_body
      %s18 = ssub.s32 %s13, 1
      %s19 = ssub.s32 %s13, 2
      %s20 = sadd.s32 %s13, 1
      %s21 = ssub.s32 %s13, %s20
      %p22 = scmp.eq.s32.totalorder %s21, 0
      %s24 = sadd.s32 %s23, 1
      %s25 = scalar_select %p22, %s23, %s24
      %p28 = pneg %p22
      %p29 = scmp.eq.s32.totalorder %s13, 1
      %p30 = por %p28, %p29
      %p31 = scmp.ne.s32.totalorder %s23, %s26
      %p32 = scmp.eq.s32.totalorder %s13, 0
      %p33 = por %p31, %p32
      %p34 = scmp.ne.s32.totalorder %s23, %s26
      %p35 = scmp.eq.s32.totalorder %s18, 1
      %p36 = por %p34, %p35
      %p37 = scmp.ne.s32.totalorder %s26, %s27
      %p38 = scmp.eq.s32.totalorder %s18, 0
      %p39 = por %p37, %p38
      %p40 = scmp.ne.s32.totalorder %s26, %s27
      %p41 = scmp.eq.s32.totalorder %s19, 1
      %p42 = por %p40, %p41
      %p44 = scmp.ne.s32.totalorder %s27, %s43
      %p45 = scmp.eq.s32.totalorder %s19, 0
      %p46 = por %p44, %p45
      %s48 = sadd.s32 %s47, 1
      %p51 = scmp.eq.s32.totalorder %s13, 1
      %p52 = scmp.ne.s32.totalorder %s47, %s49
      %p53 = scmp.eq.s32.totalorder %s13, 0
      %p54 = por %p52, %p53
      %p55 = scmp.ne.s32.totalorder %s47, %s49
      %p56 = scmp.eq.s32.totalorder %s18, 1
      %p57 = por %p55, %p56
      %p58 = scmp.ne.s32.totalorder %s49, %s50
      %p59 = scmp.eq.s32.totalorder %s18, 0
      %p60 = por %p58, %p59
      %p61 = scmp.ne.s32.totalorder %s49, %s50
      %p62 = scmp.eq.s32.totalorder %s19, 1
      %p63 = por %p61, %p62
      %p65 = scmp.ne.s32.totalorder %s50, %s64
      %p66 = scmp.eq.s32.totalorder %s19, 0
      %p67 = por %p65, %p66
      %s69 = sadd.s32 %s68, 1
      %p72 = scmp.eq.s32.totalorder %s13, 1
      %p73 = scmp.ne.s32.totalorder %s68, %s70
      %p74 = scmp.eq.s32.totalorder %s13, 0
      %p75 = por %p73, %p74
      %p76 = scmp.ne.s32.totalorder %s68, %s70
      %p77 = scmp.eq.s32.totalorder %s18, 1
      %p78 = por %p76, %p77
      %p79 = scmp.ne.s32.totalorder %s70, %s71
      %p80 = scmp.eq.s32.totalorder %s18, 0
      %p81 = por %p79, %p80
      %p82 = scmp.ne.s32.totalorder %s70, %s71
      %p83 = scmp.eq.s32.totalorder %s19, 1
      %p84 = por %p82, %p83
      %p86 = scmp.ne.s32.totalorder %s71, %s85
      %p87 = scmp.eq.s32.totalorder %s19, 0
      %p88 = por %p86, %p87
      %s90 = sadd.s32 %s89, 1
      %p93 = scmp.eq.s32.totalorder %s13, 1
      %p94 = scmp.ne.s32.totalorder %s89, %s91
      %p95 = scmp.eq.s32.totalorder %s13, 0
      %p96 = por %p94, %p95
      %p97 = scmp.ne.s32.totalorder %s89, %s91
      %p98 = scmp.eq.s32.totalorder %s18, 1
      %p99 = por %p97, %p98
      %p100 = scmp.ne.s32.totalorder %s91, %s92
      %p101 = scmp.eq.s32.totalorder %s18, 0
      %p102 = por %p100, %p101
      %p103 = scmp.ne.s32.totalorder %s91, %s92
      %p104 = scmp.eq.s32.totalorder %s19, 1
      %p105 = por %p103, %p104
      %p107 = scmp.ne.s32.totalorder %s92, %s106
      %p108 = scmp.eq.s32.totalorder %s19, 0
      %p109 = por %p107, %p108
      %s110 = ssub.s32 %s13, %s20
      %p111 = scmp.eq.s32.totalorder %s110, 0
      %s113 = sadd.s32 %s112, 1
      %s114 = scalar_select %p111, %s112, %s113
      %p117 = pneg %p111
      %p118 = scmp.eq.s32.totalorder %s13, 1
      %p119 = por %p117, %p118
      %p120 = scmp.ne.s32.totalorder %s112, %s115
      %p121 = scmp.eq.s32.totalorder %s13, 0
      %p122 = por %p120, %p121
      %p123 = scmp.ne.s32.totalorder %s112, %s115
      %p124 = scmp.eq.s32.totalorder %s18, 1
      %p125 = por %p123, %p124
      %p126 = scmp.ne.s32.totalorder %s115, %s116
      %p127 = scmp.eq.s32.totalorder %s18, 0
      %p128 = por %p126, %p127
      %p129 = scmp.ne.s32.totalorder %s115, %s116
      %p130 = scmp.eq.s32.totalorder %s19, 1
      %p131 = por %p129, %p130
      %p133 = scmp.ne.s32.totalorder %s116, %s132
      %p134 = scmp.eq.s32.totalorder %s19, 0
      %p135 = por %p133, %p134
      %p136 = scmp.le.s32.totalorder 1, %s13
      %p137 = scmp.lt.s32.totalorder %s13, 3
      %p138 = pnand %p136, %p137
      %p139 = pneg %p138
      // Predicated region
      $region9: #{tpu_custom_call.1} parent=5 // pred_check
        _
      $region10: #{tpu_custom_call.1} parent=5 // pred_check_branch
        %141 = sbr.rel (%p138) target = $region12
      $region11: #{tpu_custom_call.1} parent=5 // pred_region
        %s142 = ssub.s32 %s13, 1
        // Predicated region
        $region13: #{tpu_custom_call.1} parent=11 // pred_check
          %p143 = pneg %p60
        $region14: #{tpu_custom_call.1} parent=11 // pred_check_branch
          %145 = sbr.rel (%p143) target = $region16
        $region15: #{tpu_custom_call.1} parent=11 // pred_region
          _
        $region16: #{tpu_custom_call.1} parent=11 // pred_fallthru
          _
        // Predicated region
        $region17: #{tpu_custom_call.1} parent=11 // pred_check
          %p146 = pneg %p81
        $region18: #{tpu_custom_call.1} parent=11 // pred_check_branch
          %148 = sbr.rel (%p146) target = $region20
        $region19: #{tpu_custom_call.1} parent=11 // pred_region
          _
        $region20: #{tpu_custom_call.1} parent=11 // pred_fallthru
          _
        // Predicated region
        $region21: #{tpu_custom_call.1} parent=11 // pred_check
          %p149 = pneg %p102
        $region22: #{tpu_custom_call.1} parent=11 // pred_check_branch
          %151 = sbr.rel (%p149) target = $region24
        $region23: #{tpu_custom_call.1} parent=11 // pred_region
          _
        $region24: #{tpu_custom_call.1} parent=11 // pred_fallthru
          _
      $region12: #{tpu_custom_call.1} parent=5 // pred_fallthru
        _
      %p152 = scmp.lt.s32.totalorder %s13, 2
      // Predicated region
      $region25: #{tpu_custom_call.1} parent=5 // pred_check
        %p153 = pneg %p152
      $region26: #{tpu_custom_call.1} parent=5 // pred_check_branch
        %155 = sbr.rel (%p153) target = $region28
      $region27: #{tpu_custom_call.1} parent=5 // pred_region
        // Predicated region
        $region29: #{tpu_custom_call.1} parent=27 // pred_check
          %p156 = pneg %p33
        $region30: #{tpu_custom_call.1} parent=27 // pred_check_branch
          %158 = sbr.rel (%p156) target = $region32
        $region31: #{tpu_custom_call.1} parent=27 // pred_region
          %p159 = scmp.lt.s32.totalorder %s13, 1
          %s160 = scalar_select %p159, %s13, 1
          %s161 = smul.addr %s160, 3
          %s162 = smul.addr %s161, 8
          %s163 = scalar_lea.vmem %s0, %s162
        $region32: #{tpu_custom_call.1} parent=27 // pred_fallthru
          _
      $region28: #{tpu_custom_call.1} parent=5 // pred_fallthru
        _
      %p164 = scmp.le.s32.totalorder 1, %s13
      %p165 = scmp.lt.s32.totalorder %s13, 3
      %p166 = pnand %p164, %p165
      %p167 = pneg %p166
      // Predicated region
      $region33: #{tpu_custom_call.1} parent=5 // pred_check
        _
      $region34: #{tpu_custom_call.1} parent=5 // pred_check_branch
        %169 = sbr.rel (%p166) target = $region36
      $region35: #{tpu_custom_call.1} parent=5 // pred_region
        %s170 = ssub.s32 %s13, 1
        %p171 = scmp.lt.s32.totalorder %s18, 1
        %s172 = scalar_select %p171, %s18, 1
        %s173 = smul.addr %s172, 3
        %s174 = smul.addr %s173, 8
        %s175 = scalar_lea.vmem %s0, %s174
        %p176 = pneg %p39
        %p177 = pneg %p36
        %p178 = pneg %p60
        %p179 = pneg %p57
        %p180 = pneg %p81
        %p181 = pneg %p78
        %p182 = pneg %p102
        %p183 = pneg %p99
        %p184 = pneg %p128
        %p185 = pneg %p125
        %s186 = sand.u32 %s115, 1
        %s187 = scalar_lea.sflag [#allocation3], %s186
        %s188 = sand.u32 %s115, 1
        %s189 = smul.addr %s188, 24
        %s190 = scalar_lea.vmem [#allocation2], %s189
        %p191 = scmp.lt.s32.totalorder %s18, 1
        %s192 = scalar_select %p191, %s18, 1
        %s193 = smul.addr %s192, 3
        %s194 = smul.addr %s193, 8
        %s195 = scalar_lea.vmem %s0, %s194
        %v196 = vld [vmem:[%s195] sm:$0xff]
        %v197 = vld [vmem:[%s195 + $0x8] sm:$0xff]
        %v198 = vld [vmem:[%s195 + $0x10] sm:$0xff]
        %v199 = vld [vmem:[%s1] sm:$0xf]
        %v200 = vld [vmem:[%s2] sm:$0x1]
        %v202 = vlaneseq
        %v203 = vshrl.u32 %v202, 7
        %v204 = vsub.s32 0, %v203
        %v205 = vrot.slane %v200, %v204
        %vm207 = vcmask 31744
        %v209 = vsel %vm207, %v196, 0
        %v212 = vsel %vm207, %v197, 0
        %v215 = vsel %vm207, %v198, 0
        %vm217 = vcmask 1043456
        %v219 = vsel %vm217, %v199, 0
        %221 = vmatprep.subr.mxu0 0.0
        %222 = vmatpush1.msra.mxu0 %v219
        %223 = vmatprep.subr.mxu0 0.0
        %224 = vmatpush1.msra.mxu0 0.0
        %225 = vmatprep.subr.mxu0 0.0
        %226 = vmatpush1.msra.mxu0 0.0
        %227 = vmatprep.subr.mxu0 0.0
        %228 = vmatpush1.msra.mxu0 0.0
        %229 = vmatprep.subr.mxu0 0.0
        %230 = vmatpush1.msra.mxu0 0.0
        %231 = vmatprep.subr.mxu0 0.0
        %232 = vmatpush1.msra.mxu0 0.0
        %233 = vmatprep.subr.mxu0 0.0
        %234 = vmatpush1.msra.mxu0 0.0
        %235 = vmatprep.subr.mxu0 0.0
        %236 = vmatpush1.msra.mxu0 0.0
        %237 = vmatprep.subr.mxu0 0.0
        %238 = vmatpush1.msra.mxu0 0.0
        %239 = vmatprep.subr.mxu0 0.0
        %240 = vmatpush1.msra.mxu0 0.0
        %241 = vmatprep.subr.mxu0 0.0
        %242 = vmatpush1.msra.mxu0 0.0
        %243 = vmatprep.subr.mxu0 0.0
        %244 = vmatpush1.msra.mxu0 0.0
        %245 = vmatprep.subr.mxu0 0.0
        %246 = vmatpush1.msra.mxu0 0.0
        %247 = vmatprep.subr.mxu0 0.0
        %248 = vmatpush1.msra.mxu0 0.0
        %249 = vmatprep.subr.mxu0 0.0
        %250 = vmatpush1.msra.mxu0 0.0
        %251 = vmatprep.subr.mxu0 0.0
        %252 = vmatpush1.msra.mxu0 0.0
        %253 = vmatprep.subr.mxu0 0.0
        %254 = vmatpush1.msra.mxu0 0.0
        %255 = vmatprep.subr.mxu0 0.0
        %256 = vmatpush1.msra.mxu0 0.0
        %257 = vmatprep.subr.mxu0 0.0
        %258 = vmatpush1.msra.mxu0 0.0
        %259 = vmatprep.subr.mxu0 0.0
        %260 = vmatpush1.msra.mxu0 0.0
        %261 = vmatprep.subr.mxu0 0.0
        %262 = vmatpush1.msra.mxu0 0.0
        %263 = vmatprep.subr.mxu0 0.0
        %264 = vmatpush1.msra.mxu0 0.0
        %265 = vmatprep.subr.mxu0 0.0
        %266 = vmatpush1.msra.mxu0 0.0
        %267 = vmatprep.subr.mxu0 0.0
        %268 = vmatpush1.msra.mxu0 0.0
        %269 = vmatprep.subr.mxu0 0.0
        %270 = vmatpush1.msra.mxu0 0.0
        %271 = vmatprep.subr.mxu0 0.0
        %272 = vmatpush1.msra.mxu0 0.0
        %273 = vmatprep.subr.mxu0 0.0
        %274 = vmatpush1.msra.mxu0 0.0
        %275 = vmatprep.subr.mxu0 0.0
        %276 = vmatpush1.msra.mxu0 0.0
        %277 = vmatprep.subr.mxu0 0.0
        %278 = vmatpush1.msra.mxu0 0.0
        %279 = vmatprep.subr.mxu0 0.0
        %280 = vmatpush1.msra.mxu0 0.0
        %281 = vmatprep.subr.mxu0 0.0
        %282 = vmatpush1.msra.mxu0 0.0
        %283 = vmatprep.subr.mxu0 0.0
        %284 = vmatpush1.msra.mxu0 0.0
        %285 = vmatprep.mubr.f32.mxu0 0.0
        %286 = vmatmul.mubr.f32.gmra.mrb[0].mxu0 %v209
        %v287 = vpop.f32.mrb[0].mxu0
        %v288 = vadd.f32 %v205, %v287
        %v289 = vpop.f32.mrb[0].mxu0
        %290 = vmatprep.mubr.f32.mxu0 0.0
        %291 = vmatmul.mubr.f32.gmra.mrb[0].mxu0 %v212
        %v292 = vpop.f32.mrb[0].mxu0
        %v293 = vadd.f32 %v205, %v292
        %v294 = vpop.f32.mrb[0].mxu0
        %295 = vmatprep.mubr.f32.mxu0 0.0
        %296 = vmatmul.mubr.f32.gmra.mrb[0].mxu0 %v215
        %v297 = vpop.f32.mrb[0].mxu0
        %v298 = vadd.f32 %v205, %v297
        %v299 = vpop.f32.mrb[0].mxu0
        %300 = vdwg.mxu0
        %v301 = vld [vmem:[%s3] sm:$0xff]
        %v302 = vld [vmem:[%s3 + $0x8] sm:$0xff]
        %v303 = vld [vmem:[%s3 + $0x10] sm:$0xff]
        %v304 = vadd.f32 %v288, %v301
        %v305 = vadd.f32 %v293, %v302
        %v306 = vadd.f32 %v298, %v303
        %vm307 = vcmask 261120
        %308 = vst.msk [vmem:[%s190] sm:$0xff] %vm307, %v304
        %309 = vst.msk [vmem:[%s190 + $0x8] sm:$0xff] %vm307, %v305
        %310 = vst.msk [vmem:[%s190 + $0x10] sm:$0xff] %vm307, %v306
        %s311 = sand.u32 %s115, 1
        %s312 = scalar_lea.sflag [#allocation3], %s311
        %s313 = sand.u32 %s115, 1
        %s314 = smul.addr %s313, 24
        %s315 = scalar_lea.vmem [#allocation2], %s314
        // Predicated region
        $region37: #{tpu_custom_call.1} parent=35 // pred_check
          %p316 = pneg %p125
        $region38: #{tpu_custom_call.1} parent=35 // pred_check_branch
          %318 = sbr.rel (%p316) target = $region40
        $region39: #{tpu_custom_call.1} parent=35 // pred_region
          %s320 = ssub.s32 384, 384
          %321 = vsyncadd %s312, %s320
          %s322 = smul.addr %s18, 3
          %s323 = smul.addr %s322, 128
          %s324 = scalar_lea.hbm %s4, %s323
          %s325 = sshll.u32 %s315, 4
          %s326 = int_to_ptr.vmem [resolvable:$true] %s325
          %331 = dma.vmem_to_hbm [thread:$0]  %s326, 384, %s324, %s312, 128, 128, 8
        $region40: #{tpu_custom_call.1} parent=35 // pred_fallthru
          _
      $region36: #{tpu_custom_call.1} parent=5 // pred_fallthru
        _
      %p332 = scmp.le.s32.totalorder 2, %s13
      // Predicated region
      $region41: #{tpu_custom_call.1} parent=5 // pred_check
        %p333 = pneg %p332
      $region42: #{tpu_custom_call.1} parent=5 // pred_check_branch
        %335 = sbr.rel (%p333) target = $region44
      $region43: #{tpu_custom_call.1} parent=5 // pred_region
        %s336 = ssub.s32 %s13, 2
        // Predicated region
        $region45: #{tpu_custom_call.1} parent=43 // pred_check
          %p337 = pneg %p131
        $region46: #{tpu_custom_call.1} parent=43 // pred_check_branch
          %339 = sbr.rel (%p337) target = $region48
        $region47: #{tpu_custom_call.1} parent=43 // pred_region
          %s340 = sand.u32 %s116, 1
          %s341 = scalar_lea.sflag [#allocation3], %s340
          %s342 = sand.u32 %s116, 1
          %s343 = smul.addr %s342, 24
          %s344 = scalar_lea.vmem [#allocation2], %s343
          %345 = dma.done %s341, 384
        $region48: #{tpu_custom_call.1} parent=43 // pred_fallthru
          _
      $region44: #{tpu_custom_call.1} parent=5 // pred_fallthru
        _
    $region6: #{tpu_custom_call.1} parent=1 // loop_footer
      %s17 = sadd.s32 1, %s13
    $region7: #{tpu_custom_call.1} parent=1 // loop_footer_branch
      %12 = sbr.rel target = $region3
    $region8: #{tpu_custom_call.1} parent=1 // loop_exit
      _
    %346 = vsyncpa [#allocation3], 1
    %s347 = scalar_lea.sflag [#allocation3], 1
    %348 = vsyncpa %s347, 1

</llo_original>
